<compile_context>
chip_gen: v5e
topology: v5e:2x2
jax: 0.10.0
libtpu: 0.0.40
codegen_flags: <defaults>
</compile_context>

<pallas_src>
import functools
import math

import jax
import jax.numpy as jnp
from jax.experimental import pallas as pl
from jax.experimental.pallas import tpu as pltpu

LN_EPS = 1e-5  # PyTorch nn.LayerNorm default


def _layer_norm(x, gamma, beta, eps):
    mu = jnp.mean(x, axis=-1, keepdims=True)
    xc = x - mu
    var = jnp.mean(xc * xc, axis=-1, keepdims=True)
    return xc * jax.lax.rsqrt(var + eps) * gamma + beta


def _gelu_tanh(x):
    # TODO(synk): PyTorch nn.GELU() defaults to the exact erf form; the tanh
    # approximation is used here (and in the reference) for guaranteed Mosaic lowering.
    c = math.sqrt(2.0 / math.pi)
    return 0.5 * x * (1.0 + jnp.tanh(c * (x + 0.044715 * x * x * x)))


def pose_layer_kernel(x_ref, slab_ref, o_ref, *, batch, tokens, heads, dim, mlp_dim):
    b, n, d, m = batch, tokens, dim, mlp_dim
    dh = d // heads
    log2_dh = dh.bit_length() - 1  # dh is a power of two (asserted in wrapper)

    # ---- unpack the single parameter slab (static slices: sublane-aligned rows,
    # lane offset 0 everywhere -> no relayouts) --------------------------------
    r_wout, r_w1, r_w2, r_vec = d, 2 * d, 3 * d, 3 * d + m
    w_qkv = slab_ref[0:d, 0:3 * d]                    # (D, 3D), q cols pre-scaled
    w_out = slab_ref[r_wout:r_wout + d, 0:d]          # (D, D)
    w1 = slab_ref[r_w1:r_w1 + d, 0:m]                 # (D, M)
    w2 = slab_ref[r_w2:r_w2 + m, 0:d]                 # (M, D)
    b_qkv = slab_ref[r_vec + 0:r_vec + 1, 0:3 * d]    # (1, 3D), q part pre-scaled
    b_out = slab_ref[r_vec + 1:r_vec + 2, 0:d]
    gamma1 = slab_ref[r_vec + 2:r_vec + 3, 0:d]
    beta1 = slab_ref[r_vec + 3:r_vec + 4, 0:d]
    gamma2 = slab_ref[r_vec + 4:r_vec + 5, 0:d]
    beta2 = slab_ref[r_vec + 5:r_vec + 6, 0:d]
    b1 = slab_ref[r_vec + 6:r_vec + 7, 0:m]
    b2 = slab_ref[r_vec + 7:r_vec + 8, 0:d]

    x = x_ref[...]                                    # (B*N, D) f32

    # ---- LayerNorm 1 ---------------------------------------------------------
    h = _layer_norm(x, gamma1, beta1, LN_EPS)

    # ---- fused qkv projection: ONE (B*N, D) @ (D, 3D) MXU pass ---------------
    qkv = jnp.dot(h, w_qkv, preferred_element_type=jnp.float32) + b_qkv
    q = qkv[:, 0:d]               # already scaled by dim**-0.5 (folded at pack time)
    k = qkv[:, d:2 * d]
    v = qkv[:, 2 * d:3 * d]

    # ---- block-diagonal head mask G built in-kernel (VPU only) ---------------
    row = jax.lax.broadcasted_iota(jnp.int32, (d, d), 0)
    col = jax.lax.broadcasted_iota(jnp.int32, (d, d), 1)
    g = ((row >> log2_dh) == (col >> log2_dh)).astype(jnp.float32)   # (D, D)

    # ---- attention: scores via lane products + G matmul (no head transposes) -
    q3 = q.reshape(b, n, d)
    k3 = k.reshape(b, n, d)
    v3 = v.reshape(b, n, d)
    prod = q3[:, :, None, :] * k3[:, None, :, :]                    # (B,N,N,D) VPU
    # s[(b,i,j), l] = sum_{l' in head(l)} q[b,i,l'] * k[b,j,l']  (scaled score,
    # replicated across the head's d lanes).
    s = jnp.dot(prod.reshape(b * n * n, d), g,
                preferred_element_type=jnp.float32)                 # (B*N*N, D)
    s = s.reshape(b * n, n, d)                                      # rows=(b,i), sub=j

    # Softmax over j (sublane axis); per-lane softmax == per-head softmax because
    # scores are identical across a head's d lanes.  Exact divide for fidelity.
    mx = jnp.max(s, axis=1, keepdims=True)
    e = jnp.exp(s - mx)
    attn = e / jnp.sum(e, axis=1, keepdims=True)

    # out[b,i,l] = sum_j attn[(b,i),j,l] * v[b,j,l]  -> already 'b n (h d)' order.
    out = jnp.sum(attn.reshape(b, n, n, d) * v3[:, None, :, :], axis=2)
    out = out.reshape(b * n, d)
    attn_out = jnp.dot(out, w_out, preferred_element_type=jnp.float32) + b_out

    # ---- residual 1, LayerNorm 2, FFN (GELU), residual 2 ---------------------
    x2 = x + attn_out
    h2 = _layer_norm(x2, gamma2, beta2, LN_EPS)
    f1 = _gelu_tanh(jnp.dot(h2, w1, preferred_element_type=jnp.float32) + b1)
    f2 = jnp.dot(f1, w2, preferred_element_type=jnp.float32) + b2
    o_ref[...] = (x2 + f2).astype(o_ref.dtype)


def pose_encoder_layer_pallas(x, params, *, heads):
    """One KITPose PoseEncoderLayer forward. x: (B, N, D)."""
    B, N, D = x.shape
    (w_qkv, b_qkv, w_out, b_out, g1, be1, g2, be2, w1, b1, w2, b2) = params
    M = w1.shape[1]
    dh = D // heads
    assert dh * heads == D and (dh & (dh - 1)) == 0, "head dim must be a power of two"
    scale = D ** (-0.5)  # scale_with_head=False (KITPose_base default)

    # One-time parameter prep: fold the softmax scale into the q columns.
    col_scale = jnp.concatenate([jnp.full((D,), scale, x.dtype),
                                 jnp.ones((2 * D,), x.dtype)])
    w_qkv_s = w_qkv * col_scale[None, :]
    b_qkv_s = b_qkv * col_scale

    # Pack ALL parameters into one lane-dense (rows, 128) slab -> a single DMA.
    W = 128

    def pad_mat(w):
        return jnp.pad(w, ((0, 0), (0, W - w.shape[1])))

    def pad_vec(v):
        return jnp.pad(v, (0, W - v.shape[0]))

    vec_rows = jnp.stack([pad_vec(b_qkv_s), pad_vec(b_out), pad_vec(g1),
                          pad_vec(be1), pad_vec(g2), pad_vec(be2),
                          pad_vec(b1), pad_vec(b2)])
    slab = jnp.concatenate([pad_mat(w_qkv_s), pad_mat(w_out),
                            pad_mat(w1), pad_mat(w2), vec_rows], axis=0)
    R = slab.shape[0]  # 3*D + M + 8 rows (multiple of 8)

    x2 = x.reshape(B * N, D)
    kernel = functools.partial(pose_layer_kernel, batch=B, tokens=N,
                               heads=heads, dim=D, mlp_dim=M)

    y2 = pl.pallas_call(
        kernel,
        out_shape=jax.ShapeDtypeStruct((B * N, D), x.dtype),
        # Whole (tiny) problem in one step: 2 input DMAs, no per-step overhead.
        # With a real (larger-batch / multi-layer) workload, add a leading
        # "parallel" grid axis so v7x's second TensorCore gets work.
        grid=(1,),
        in_specs=[pl.BlockSpec((B * N, D), lambda i: (0, 0)),   # activations
                  pl.BlockSpec((R, W), lambda i: (0, 0))],      # packed params
        out_specs=pl.BlockSpec((B * N, D), lambda i: (0, 0)),
        compiler_params=pltpu.CompilerParams(
            dimension_semantics=("arbitrary",)),
    )(x2, slab)
    return y2.reshape(B, N, D)


def pose_encoder_layer_reference(x, params, *, heads):
    B, N, D = x.shape
    (w_qkv, b_qkv, w_out, b_out, g1, be1, g2, be2, w1, b1, w2, b2) = params
    dh = D // heads
    scale = D ** (-0.5)

    def ln(t, g, b):
        mu = t.mean(-1, keepdims=True)
        var = ((t - mu) ** 2).mean(-1, keepdims=True)
        return (t - mu) / jnp.sqrt(var + LN_EPS) * g + b

    h = ln(x, g1, be1)
    qkv = jnp.einsum('bnd,de->bne', h, w_qkv) + b_qkv
    q, k, v = jnp.split(qkv, 3, axis=-1)

    def to_heads(t):
        return t.reshape(B, N, heads, dh).transpose(0, 2, 1, 3)

    q, k, v = map(to_heads, (q, k, v))
    dots = jnp.einsum('bhid,bhjd->bhij', q, k) * scale
    attn = jax.nn.softmax(dots, axis=-1)
    out = jnp.einsum('bhij,bhjd->bhid', attn, v)
    out = out.transpose(0, 2, 1, 3).reshape(B, N, D)
    out = jnp.einsum('bnd,de->bne', out, w_out) + b_out
    x = x + out
    h2 = ln(x, g2, be2)
    f = _gelu_tanh(jnp.einsum('bnd,dm->bnm', h2, w1) + b1)
    f = jnp.einsum('bnm,md->bnd', f, w2) + b2
    return x + f


if __name__ == "__main__":
    # Small shapes consistent with the module: (b, tokens, dim), heads=8,
    # mlp_dim = dim * mlp_ratio.
    B, N, DIM, HEADS, MLP = 2, 8, 32, 8, 64

    key = jax.random.PRNGKey(0)
    keys = jax.random.split(key, 13)

    x = jax.random.normal(keys[0], (B, N, DIM), dtype=jnp.float32)
    # PyTorch nn.Linear stores weight as (out, in); (in, out) kept here for x @ W.
    w_qkv = jax.random.normal(keys[1], (DIM, 3 * DIM), jnp.float32) * 0.05
    b_qkv = jax.random.normal(keys[2], (3 * DIM,), jnp.float32) * 0.05
    w_out = jax.random.normal(keys[3], (DIM, DIM), jnp.float32) * 0.05
    b_out = jax.random.normal(keys[4], (DIM,), jnp.float32) * 0.05
    g1 = 1.0 + 0.05 * jax.random.normal(keys[5], (DIM,), jnp.float32)
    be1 = 0.05 * jax.random.normal(keys[6], (DIM,), jnp.float32)
    g2 = 1.0 + 0.05 * jax.random.normal(keys[7], (DIM,), jnp.float32)
    be2 = 0.05 * jax.random.normal(keys[8], (DIM,), jnp.float32)
    w1 = jax.random.normal(keys[9], (DIM, MLP), jnp.float32) * 0.05
    b1 = jax.random.normal(keys[10], (MLP,), jnp.float32) * 0.05
    w2 = jax.random.normal(keys[11], (MLP, DIM), jnp.float32) * 0.05
    b2 = jax.random.normal(keys[12], (DIM,), jnp.float32) * 0.05
    params = (w_qkv, b_qkv, w_out, b_out, g1, be1, g2, be2, w1, b1, w2, b2)

    y = pose_encoder_layer_pallas(x, params, heads=HEADS)
    jax.block_until_ready(y)

    y_ref = pose_encoder_layer_reference(x, params, heads=HEADS)
    # Tolerance covers MXU f32 (bf16 multi-pass) precision differences between the
    # Pallas dots and the XLA reference einsums.
    assert jnp.allclose(y, y_ref, atol=2e-3, rtol=2e-3), \
        float(jnp.max(jnp.abs(y - y_ref)))

    print("KERNEL_OK")
</pallas_src>

<mosaic_0001>
module attributes {stable_mosaic.version = 11 : i64} {
  func.func @pose_layer_kernel(%arg0: i32, %arg1: memref<16x32xf32, #tpu.memory_space<vmem>>, %arg2: memref<168x128xf32, #tpu.memory_space<vmem>>, %arg3: memref<16x32xf32, #tpu.memory_space<vmem>>) attributes {dimension_semantics = [#tpu.dimension_semantics<arbitrary>], iteration_bounds = array<i64: 1>, scalar_prefetch = 0 : i64, scratch_operands = 0 : i64, tpu.core_type = #tpu.core_type<tc>, window_params = [{pipeline_mode = #tpu.pipeline_mode<synchronous>, transform_indices = @transform_0, window_bounds = array<i64: 16, 32>}, {pipeline_mode = #tpu.pipeline_mode<synchronous>, transform_indices = @transform_1, window_bounds = array<i64: 168, 128>}, {pipeline_mode = #tpu.pipeline_mode<synchronous>, transform_indices = @transform_2, window_bounds = array<i64: 16, 32>}]} {
    %c0 = arith.constant 0 : index
    %c0_0 = arith.constant 0 : index
    %0 = vector.load %arg2[%c0, %c0_0] : memref<168x128xf32, #tpu.memory_space<vmem>>, vector<32x96xf32>
    %c32 = arith.constant 32 : index
    %c0_1 = arith.constant 0 : index
    %1 = vector.load %arg2[%c32, %c0_1] : memref<168x128xf32, #tpu.memory_space<vmem>>, vector<32x32xf32>
    %c64 = arith.constant 64 : index
    %c0_2 = arith.constant 0 : index
    %2 = vector.load %arg2[%c64, %c0_2] : memref<168x128xf32, #tpu.memory_space<vmem>>, vector<32x64xf32>
    %c96 = arith.constant 96 : index
    %c0_3 = arith.constant 0 : index
    %3 = vector.load %arg2[%c96, %c0_3] : memref<168x128xf32, #tpu.memory_space<vmem>>, vector<64x32xf32>
    %c160 = arith.constant 160 : index
    %c0_4 = arith.constant 0 : index
    %4 = vector.load %arg2[%c160, %c0_4] : memref<168x128xf32, #tpu.memory_space<vmem>>, vector<1x96xf32>
    %c161 = arith.constant 161 : index
    %c0_5 = arith.constant 0 : index
    %5 = vector.load %arg2[%c161, %c0_5] : memref<168x128xf32, #tpu.memory_space<vmem>>, vector<1x32xf32>
    %c162 = arith.constant 162 : index
    %c0_6 = arith.constant 0 : index
    %6 = vector.load %arg2[%c162, %c0_6] : memref<168x128xf32, #tpu.memory_space<vmem>>, vector<1x32xf32>
    %c163 = arith.constant 163 : index
    %c0_7 = arith.constant 0 : index
    %7 = vector.load %arg2[%c163, %c0_7] : memref<168x128xf32, #tpu.memory_space<vmem>>, vector<1x32xf32>
    %c164 = arith.constant 164 : index
    %c0_8 = arith.constant 0 : index
    %8 = vector.load %arg2[%c164, %c0_8] : memref<168x128xf32, #tpu.memory_space<vmem>>, vector<1x32xf32>
    %c165 = arith.constant 165 : index
    %c0_9 = arith.constant 0 : index
    %9 = vector.load %arg2[%c165, %c0_9] : memref<168x128xf32, #tpu.memory_space<vmem>>, vector<1x32xf32>
    %c166 = arith.constant 166 : index
    %c0_10 = arith.constant 0 : index
    %10 = vector.load %arg2[%c166, %c0_10] : memref<168x128xf32, #tpu.memory_space<vmem>>, vector<1x64xf32>
    %c167 = arith.constant 167 : index
    %c0_11 = arith.constant 0 : index
    %11 = vector.load %arg2[%c167, %c0_11] : memref<168x128xf32, #tpu.memory_space<vmem>>, vector<1x32xf32>
    %c0_12 = arith.constant 0 : index
    %c0_13 = arith.constant 0 : index
    %12 = vector.load %arg1[%c0_12, %c0_13] : memref<16x32xf32, #tpu.memory_space<vmem>>, vector<16x32xf32>
    %cst = arith.constant dense<0.000000e+00> : vector<16xf32>
    %13 = vector.multi_reduction <add>, %12, %cst [1] : vector<16x32xf32> to vector<16xf32>
    %14 = vector.shape_cast %13 : vector<16xf32> to vector<16x1xf32>
    %cst_14 = arith.constant 3.200000e+01 : f32
    %15 = vector.broadcast %cst_14 : f32 to vector<16x1xf32>
    %16 = arith.divf %14, %15 : vector<16x1xf32>
    %17 = vector.broadcast %16 : vector<16x1xf32> to vector<16x32xf32>
    %18 = arith.subf %12, %17 : vector<16x32xf32>
    %19 = arith.mulf %18, %18 : vector<16x32xf32>
    %cst_15 = arith.constant dense<0.000000e+00> : vector<16xf32>
    %20 = vector.multi_reduction <add>, %19, %cst_15 [1] : vector<16x32xf32> to vector<16xf32>
    %21 = vector.shape_cast %20 : vector<16xf32> to vector<16x1xf32>
    %cst_16 = arith.constant 3.200000e+01 : f32
    %22 = vector.broadcast %cst_16 : f32 to vector<16x1xf32>
    %23 = arith.divf %21, %22 : vector<16x1xf32>
    %cst_17 = arith.constant 9.99999974E-6 : f32
    %24 = vector.broadcast %cst_17 : f32 to vector<16x1xf32>
    %25 = arith.addf %23, %24 : vector<16x1xf32>
    %26 = math.rsqrt %25 : vector<16x1xf32>
    %27 = vector.broadcast %26 : vector<16x1xf32> to vector<16x32xf32>
    %28 = arith.mulf %18, %27 : vector<16x32xf32>
    %29 = vector.broadcast %6 : vector<1x32xf32> to vector<16x32xf32>
    %30 = arith.mulf %28, %29 : vector<16x32xf32>
    %31 = vector.broadcast %7 : vector<1x32xf32> to vector<16x32xf32>
    %32 = arith.addf %30, %31 : vector<16x32xf32>
    %cst_18 = arith.constant dense<0.000000e+00> : vector<16x96xf32>
    %33 = tpu.matmul %32, %0, %cst_18 {dimension_numbers = #tpu.dot_dimension_numbers<[1], [0], [0], [1], [0, 0, 1, 1], [], []>} : vector<16x32xf32>, vector<32x96xf32>, vector<16x96xf32> -> vector<16x96xf32>
    %34 = vector.broadcast %4 : vector<1x96xf32> to vector<16x96xf32>
    %35 = arith.addf %33, %34 : vector<16x96xf32>
    %36 = vector.extract_strided_slice %35 {offsets = [0, 0], sizes = [16, 32], strides = [1, 1]} : vector<16x96xf32> to vector<16x32xf32>
    %37 = vector.extract_strided_slice %35 {offsets = [0, 32], sizes = [16, 32], strides = [1, 1]} : vector<16x96xf32> to vector<16x32xf32>
    %38 = vector.extract_strided_slice %35 {offsets = [0, 64], sizes = [16, 32], strides = [1, 1]} : vector<16x96xf32> to vector<16x32xf32>
    %39 = tpu.iota {dimensions = array<i32: 0>} : vector<32x32xi32>
    %40 = tpu.iota {dimensions = array<i32: 1>} : vector<32x32xi32>
    %c2_i32 = arith.constant 2 : i32
    %41 = vector.broadcast %c2_i32 : i32 to vector<32x32xi32>
    %42 = arith.shrsi %39, %41 : vector<32x32xi32>
    %c2_i32_19 = arith.constant 2 : i32
    %43 = vector.broadcast %c2_i32_19 : i32 to vector<32x32xi32>
    %44 = arith.shrsi %40, %43 : vector<32x32xi32>
    %45 = arith.cmpi eq, %42, %44 : vector<32x32xi32>
    %46 = arith.extui %45 : vector<32x32xi1> to vector<32x32xi32>
    %47 = arith.sitofp %46 : vector<32x32xi32> to vector<32x32xf32>
    %48 = vector.shape_cast %36 : vector<16x32xf32> to vector<2x8x32xf32>
    %49 = vector.shape_cast %37 : vector<16x32xf32> to vector<2x8x32xf32>
    %50 = vector.shape_cast %38 : vector<16x32xf32> to vector<2x8x32xf32>
    %51 = vector.shape_cast %48 : vector<2x8x32xf32> to vector<2x8x1x32xf32>
    %52 = vector.shape_cast %49 : vector<2x8x32xf32> to vector<2x1x8x32xf32>
    %53 = vector.broadcast %51 : vector<2x8x1x32xf32> to vector<2x8x8x32xf32>
    %54 = vector.broadcast %52 : vector<2x1x8x32xf32> to vector<2x8x8x32xf32>
    %55 = arith.mulf %53, %54 : vector<2x8x8x32xf32>
    %56 = vector.shape_cast %55 : vector<2x8x8x32xf32> to vector<128x32xf32>
    %cst_20 = arith.constant dense<0.000000e+00> : vector<128x32xf32>
    %57 = tpu.matmul %56, %47, %cst_20 {dimension_numbers = #tpu.dot_dimension_numbers<[1], [0], [0], [1], [0, 0, 1, 1], [], []>} : vector<128x32xf32>, vector<32x32xf32>, vector<128x32xf32> -> vector<128x32xf32>
    %58 = vector.shape_cast %57 : vector<128x32xf32> to vector<16x8x32xf32>
    %cst_21 = arith.constant dense<0xFF800000> : vector<16x32xf32>
    %59 = vector.multi_reduction <maximumf>, %58, %cst_21 [1] : vector<16x8x32xf32> to vector<16x32xf32>
    %60 = vector.shape_cast %59 : vector<16x32xf32> to vector<16x1x32xf32>
    %61 = vector.broadcast %60 : vector<16x1x32xf32> to vector<16x8x32xf32>
    %62 = arith.subf %58, %61 : vector<16x8x32xf32>
    %63 = math.exp %62 : vector<16x8x32xf32>
    %cst_22 = arith.constant dense<0.000000e+00> : vector<16x32xf32>
    %64 = vector.multi_reduction <add>, %63, %cst_22 [1] : vector<16x8x32xf32> to vector<16x32xf32>
    %65 = vector.shape_cast %64 : vector<16x32xf32> to vector<16x1x32xf32>
    %66 = vector.broadcast %65 : vector<16x1x32xf32> to vector<16x8x32xf32>
    %67 = arith.divf %63, %66 : vector<16x8x32xf32>
    %68 = vector.shape_cast %67 : vector<16x8x32xf32> to vector<2x8x8x32xf32>
    %69 = vector.shape_cast %50 : vector<2x8x32xf32> to vector<2x1x8x32xf32>
    %70 = vector.broadcast %69 : vector<2x1x8x32xf32> to vector<2x8x8x32xf32>
    %71 = arith.mulf %68, %70 : vector<2x8x8x32xf32>
    %cst_23 = arith.constant dense<0.000000e+00> : vector<2x8x32xf32>
    %72 = vector.multi_reduction <add>, %71, %cst_23 [2] : vector<2x8x8x32xf32> to vector<2x8x32xf32>
    %73 = vector.shape_cast %72 : vector<2x8x32xf32> to vector<16x32xf32>
    %cst_24 = arith.constant dense<0.000000e+00> : vector<16x32xf32>
    %74 = tpu.matmul %73, %1, %cst_24 {dimension_numbers = #tpu.dot_dimension_numbers<[1], [0], [0], [1], [0, 0, 1, 1], [], []>} : vector<16x32xf32>, vector<32x32xf32>, vector<16x32xf32> -> vector<16x32xf32>
    %75 = vector.broadcast %5 : vector<1x32xf32> to vector<16x32xf32>
    %76 = arith.addf %74, %75 : vector<16x32xf32>
    %77 = arith.addf %12, %76 : vector<16x32xf32>
    %cst_25 = arith.constant dense<0.000000e+00> : vector<16xf32>
    %78 = vector.multi_reduction <add>, %77, %cst_25 [1] : vector<16x32xf32> to vector<16xf32>
    %79 = vector.shape_cast %78 : vector<16xf32> to vector<16x1xf32>
    %cst_26 = arith.constant 3.200000e+01 : f32
    %80 = vector.broadcast %cst_26 : f32 to vector<16x1xf32>
    %81 = arith.divf %79, %80 : vector<16x1xf32>
    %82 = vector.broadcast %81 : vector<16x1xf32> to vector<16x32xf32>
    %83 = arith.subf %77, %82 : vector<16x32xf32>
    %84 = arith.mulf %83, %83 : vector<16x32xf32>
    %cst_27 = arith.constant dense<0.000000e+00> : vector<16xf32>
    %85 = vector.multi_reduction <add>, %84, %cst_27 [1] : vector<16x32xf32> to vector<16xf32>
    %86 = vector.shape_cast %85 : vector<16xf32> to vector<16x1xf32>
    %cst_28 = arith.constant 3.200000e+01 : f32
    %87 = vector.broadcast %cst_28 : f32 to vector<16x1xf32>
    %88 = arith.divf %86, %87 : vector<16x1xf32>
    %cst_29 = arith.constant 9.99999974E-6 : f32
    %89 = vector.broadcast %cst_29 : f32 to vector<16x1xf32>
    %90 = arith.addf %88, %89 : vector<16x1xf32>
    %91 = math.rsqrt %90 : vector<16x1xf32>
    %92 = vector.broadcast %91 : vector<16x1xf32> to vector<16x32xf32>
    %93 = arith.mulf %83, %92 : vector<16x32xf32>
    %94 = vector.broadcast %8 : vector<1x32xf32> to vector<16x32xf32>
    %95 = arith.mulf %93, %94 : vector<16x32xf32>
    %96 = vector.broadcast %9 : vector<1x32xf32> to vector<16x32xf32>
    %97 = arith.addf %95, %96 : vector<16x32xf32>
    %cst_30 = arith.constant dense<0.000000e+00> : vector<16x64xf32>
    %98 = tpu.matmul %97, %2, %cst_30 {dimension_numbers = #tpu.dot_dimension_numbers<[1], [0], [0], [1], [0, 0, 1, 1], [], []>} : vector<16x32xf32>, vector<32x64xf32>, vector<16x64xf32> -> vector<16x64xf32>
    %99 = vector.broadcast %10 : vector<1x64xf32> to vector<16x64xf32>
    %100 = arith.addf %98, %99 : vector<16x64xf32>
    %cst_31 = arith.constant 5.000000e-01 : f32
    %101 = vector.broadcast %cst_31 : f32 to vector<16x64xf32>
    %102 = arith.mulf %101, %100 : vector<16x64xf32>
    %cst_32 = arith.constant 4.471500e-02 : f32
    %103 = vector.broadcast %cst_32 : f32 to vector<16x64xf32>
    %104 = arith.mulf %103, %100 : vector<16x64xf32>
    %105 = arith.mulf %104, %100 : vector<16x64xf32>
    %106 = arith.mulf %105, %100 : vector<16x64xf32>
    %107 = arith.addf %100, %106 : vector<16x64xf32>
    %cst_33 = arith.constant 0.797884583 : f32
    %108 = vector.broadcast %cst_33 : f32 to vector<16x64xf32>
    %109 = arith.mulf %108, %107 : vector<16x64xf32>
    %110 = math.tanh %109 : vector<16x64xf32>
    %cst_34 = arith.constant 1.000000e+00 : f32
    %111 = vector.broadcast %cst_34 : f32 to vector<16x64xf32>
    %112 = arith.addf %111, %110 : vector<16x64xf32>
    %113 = arith.mulf %102, %112 : vector<16x64xf32>
    %cst_35 = arith.constant dense<0.000000e+00> : vector<16x32xf32>
    %114 = tpu.matmul %113, %3, %cst_35 {dimension_numbers = #tpu.dot_dimension_numbers<[1], [0], [0], [1], [0, 0, 1, 1], [], []>} : vector<16x64xf32>, vector<64x32xf32>, vector<16x32xf32> -> vector<16x32xf32>
    %115 = vector.broadcast %11 : vector<1x32xf32> to vector<16x32xf32>
    %116 = arith.addf %114, %115 : vector<16x32xf32>
    %117 = arith.addf %77, %116 : vector<16x32xf32>
    %c0_36 = arith.constant 0 : index
    %c0_37 = arith.constant 0 : index
    %118 = vector.load %arg3[%c0_36, %c0_37] : memref<16x32xf32, #tpu.memory_space<vmem>>, vector<16x32xf32>
    tpu.vector_store %arg3[%c0_36, %c0_37], %117 {strides = array<i32>} : memref<16x32xf32, #tpu.memory_space<vmem>>, vector<16x32xf32>,
    return
  }
  func.func @transform_0(%arg0: i32) -> (i32, i32) {
    %c0_i32 = arith.constant 0 : i32
    %c0_i32_0 = arith.constant 0 : i32
    %c0_i32_1 = arith.constant 0 : i32
    return %c0_i32, %c0_i32_0 : i32, i32
  }
  func.func @transform_1(%arg0: i32) -> (i32, i32) {
    %c0_i32 = arith.constant 0 : i32
    %c0_i32_0 = arith.constant 0 : i32
    %c0_i32_1 = arith.constant 0 : i32
    return %c0_i32, %c0_i32_0 : i32, i32
  }
  func.func @transform_2(%arg0: i32) -> (i32, i32) {
    %c0_i32 = arith.constant 0 : i32
    %c0_i32_0 = arith.constant 0 : i32
    %c0_i32_1 = arith.constant 0 : i32
    return %c0_i32, %c0_i32_0 : i32, i32
  }
}

</mosaic_0001>

<llo_original>
// kernel: tpu_custom_call.1
$region0: #{tpu_custom_call.1}
  #allocation0 [shape = 'u32[]', space=smem, size = 0x4, offset = 0x4, fixed_abs, tag = 'smem constant byte address 0x4 - core index']
  #allocation1 [shape = 'u32[72,128]{1,0:T(1,128)}', space=vmem, size = 0x9000, scoped, tag = 'internal scratch']
  %s0 = inlined_call_operand.hbm [shape: f32[16,32], index: 0, kind: input, shape index: {}]
  %s1 = inlined_call_operand.hbm [shape: f32[168,128], index: 1, kind: input, shape index: {}]
  %s2 = inlined_call_operand.hbm [shape: f32[16,32], index: 2, kind: output, shape index: {}]
  %s3 = sld [smem:[#allocation0]]
  $region26: #{tpu_custom_call.1} parent=0
    _
  %s5 = ssub.s32 1, %s3
  %s6 = scalar_select 0, %s5, %s3
  $region1: #{tpu_custom_call.1} parent=0
    #allocation2 [shape = 'u8[8192]{0}', space=vmem, size = 0x2000, scoped, tag = 'input window, operand 0, single buffered']
    #allocation3 [shape = 's32[1]{0}', space=sflag, size = 0x4, scoped, tag = 'scoped memory for tpu_custom_call.1']
    #allocation4 [shape = 's32[1]{0}', space=sflag, size = 0x4, scoped, tag = 'scoped memory for tpu_custom_call.1']
    #allocation5 [shape = 'u8[86016]{0}', space=vmem, size = 0x15000, scoped, tag = 'input window, operand 1, single buffered']
    #allocation6 [shape = 's32[1]{0}', space=sflag, size = 0x4, scoped, tag = 'scoped memory for tpu_custom_call.1']
    #allocation7 [shape = 'u8[8192]{0}', space=vmem, size = 0x2000, scoped, tag = 'output window, operand 0, single buffered']
    %7 = vsyncpa [#allocation3], 0
    %8 = vsyncpa [#allocation6], 0
    %9 = vsyncpa [#allocation4], 0
    // Predicated region
    $region2: #{tpu_custom_call.1} parent=1 // pred_check
      _
    $region3: #{tpu_custom_call.1} parent=1 // pred_check_branch
      %11 = sbr.rel (0) target = $region5
    $region4: #{tpu_custom_call.1} parent=1 // pred_region
      %13 = vsyncadd [#allocation3], 0
      %s14 = sshll.u32 %s0, 4
      %s15 = int_to_ptr.hbm [resolvable:$true] %s14
      %s16 = sshll.u32 [#allocation2], 4
      %s17 = int_to_ptr.vmem [resolvable:$true] %s16
      %22 = dma.hbm_to_vmem [thread:$0]  %s15, 256, %s17, [#allocation3], 128, 128, 8
    $region5: #{tpu_custom_call.1} parent=1 // pred_fallthru
      _
    // Predicated region
    $region6: #{tpu_custom_call.1} parent=1 // pred_check
      _
    $region7: #{tpu_custom_call.1} parent=1 // pred_check_branch
      %24 = sbr.rel (0) target = $region9
    $region8: #{tpu_custom_call.1} parent=1 // pred_region
      %26 = vsyncadd [#allocation6], 0
      %s27 = sshll.u32 %s1, 4
      %s28 = int_to_ptr.hbm [resolvable:$true] %s27
      %s29 = sshll.u32 [#allocation5], 4
      %s30 = int_to_ptr.vmem [resolvable:$true] %s29
      %35 = dma.hbm_to_vmem [thread:$0]  %s28, 2688, %s30, [#allocation6], 128, 128, 8
    $region9: #{tpu_custom_call.1} parent=1 // pred_fallthru
      _
    // Predicated region
    $region10: #{tpu_custom_call.1} parent=1 // pred_check
      _
    $region11: #{tpu_custom_call.1} parent=1 // pred_check_branch
      %37 = sbr.rel (0) target = $region13
    $region12: #{tpu_custom_call.1} parent=1 // pred_region
      %39 = dma.done [#allocation3], 256
    $region13: #{tpu_custom_call.1} parent=1 // pred_fallthru
      _
    // Predicated region
    $region14: #{tpu_custom_call.1} parent=1 // pred_check
      _
    $region15: #{tpu_custom_call.1} parent=1 // pred_check_branch
      %41 = sbr.rel (0) target = $region17
    $region16: #{tpu_custom_call.1} parent=1 // pred_region
      %43 = dma.done [#allocation6], 2688
    $region17: #{tpu_custom_call.1} parent=1 // pred_fallthru
      _
    %v44 = vld [vmem:[#allocation5] sm:$0xff]
    %v45 = vld [vmem:[#allocation5 + $0x8] sm:$0xff]
    %v46 = vld [vmem:[#allocation5 + $0x10] sm:$0xff]
    %v47 = vld [vmem:[#allocation5 + $0x18] sm:$0xff]
    %v48 = vld [vmem:[#allocation5 + $0x20] sm:$0xff]
    %v49 = vld [vmem:[#allocation5 + $0x28] sm:$0xff]
    %v50 = vld [vmem:[#allocation5 + $0x30] sm:$0xff]
    %v51 = vld [vmem:[#allocation5 + $0x38] sm:$0xff]
    %v52 = vld [vmem:[#allocation5 + $0x40] sm:$0xff]
    %v53 = vld [vmem:[#allocation5 + $0x48] sm:$0xff]
    %v54 = vld [vmem:[#allocation5 + $0x50] sm:$0xff]
    %v55 = vld [vmem:[#allocation5 + $0x58] sm:$0xff]
    %v56 = vld [vmem:[#allocation5 + $0x60] sm:$0xff]
    %v57 = vld [vmem:[#allocation5 + $0x68] sm:$0xff]
    %v58 = vld [vmem:[#allocation5 + $0x70] sm:$0xff]
    %v59 = vld [vmem:[#allocation5 + $0x78] sm:$0xff]
    %v60 = vld [vmem:[#allocation5 + $0x80] sm:$0xff]
    %v61 = vld [vmem:[#allocation5 + $0x88] sm:$0xff]
    %v62 = vld [vmem:[#allocation5 + $0x90] sm:$0xff]
    %v63 = vld [vmem:[#allocation5 + $0x98] sm:$0xff]
    %v64 = vld [vmem:[#allocation5 + $0xa0] sm:$0x1]
    %v65 = vld [vmem:[#allocation5 + $0xa1] sm:$0x1]
    %v66 = vld [vmem:[#allocation5 + $0xa2] sm:$0x1]
    %v67 = vld [vmem:[#allocation5 + $0xa3] sm:$0x1]
    %v68 = vld [vmem:[#allocation5 + $0xa4] sm:$0x1]
    %v69 = vld [vmem:[#allocation5 + $0xa5] sm:$0x1]
    %v70 = vld [vmem:[#allocation5 + $0xa6] sm:$0x1]
    %v71 = vld [vmem:[#allocation5 + $0xa7] sm:$0x1]
    %v72 = vld [vmem:[#allocation2] sm:$0xff]
    %v73 = vld [vmem:[#allocation2 + $0x8] sm:$0xff]
    %vm74 = vcmask 261120
    %v75 = vsel %vm74, %v72, 0.0
    %76 = vadd.xlane.f32.xlu0 %v75
    %v77 = vpop.xlane.xlu0 %76
    %v78 = vsel %vm74, %v73, 0.0
    %79 = vadd.xlane.f32.xlu0 %v78
    %v80 = vpop.xlane.xlu0 %79
    %v81 = vrcp.pop 32.0
    %v82 = vmul.f32 32.0, %v81
    %v83 = vsub.f32 1.0, %v82
    %v84 = vmul.f32 %v81, %v83
    %v85 = vadd.f32 %v81, %v84
    %vm86 = vweird.f32 %v81
    %v87 = vsel %vm86, %v81, %v85
    %v88 = vmul.f32 %v77, %v87
    %v89 = vmul.f32 %v80, %v87
    %v90 = vsub.f32 %v72, %v88
    %v91 = vsub.f32 %v73, %v89
    %v92 = vmul.f32 %v90, %v90
    %v93 = vmul.f32 %v91, %v91
    %v94 = vsel %vm74, %v92, 0.0
    %95 = vadd.xlane.f32.xlu0 %v94
    %v96 = vpop.xlane.xlu0 %95
    %v97 = vsel %vm74, %v93, 0.0
    %98 = vadd.xlane.f32.xlu0 %v97
    %v99 = vpop.xlane.xlu0 %98
    %v100 = vmul.f32 %v96, %v87
    %v101 = vmul.f32 %v99, %v87
    %v102 = vadd.f32 %v100, 1e-05
    %v103 = vadd.f32 %v101, 1e-05
    %v104 = vrsqrt.pop %v102
    %v105 = vmul.f32 %v104, %v102
    %v106 = vmul.f32 %v105, %v104
    %v107 = vmul.f32 0.5, %v106
    %v108 = vsub.f32 1.5, %v107
    %v109 = vmul.f32 %v104, %v108
    %vm110 = vweird.f32 %v102
    %vm111 = vweird.f32 %v104
    %vm112 = vmor %vm110, %vm111
    %v113 = vsel %vm112, %v104, %v109
    %v114 = vrsqrt.pop %v103
    %v115 = vmul.f32 %v114, %v103
    %v116 = vmul.f32 %v115, %v114
    %v117 = vmul.f32 0.5, %v116
    %v118 = vsub.f32 1.5, %v117
    %v119 = vmul.f32 %v114, %v118
    %vm120 = vweird.f32 %v103
    %vm121 = vweird.f32 %v114
    %vm122 = vmor %vm120, %vm121
    %v123 = vsel %vm122, %v114, %v119
    %v124 = vmul.f32 %v90, %v113
    %v125 = vmul.f32 %v91, %v123
    %v126 = vperm.slane %v66, 0
    %v127 = vmul.f32 %v124, %v126
    %v128 = vmul.f32 %v125, %v126
    %v129 = vperm.slane %v67, 0
    %v130 = vadd.f32 %v127, %v129
    %v131 = vadd.f32 %v128, %v129
    %v132 = vperm.slane %v64, 0
    %v134 = vsel %vm74, %v130, 0
    %v137 = vsel %vm74, %v131, 0
    %139 = vmatpush.msra.mxu0 0.0
    %140 = vmatpush.msra.mxu0 0.0
    %141 = vmatpush.msra.mxu0 0.0
    %142 = vmatpush.msra.mxu0 0.0
    %143 = vmatpush.msra.mxu0 0.0
    %144 = vmatpush.msra.mxu0 0.0
    %145 = vmatpush.msra.mxu0 0.0
    %146 = vmatpush.msra.mxu0 0.0
    %147 = vmatpush.msra.mxu0 0.0
    %148 = vmatpush.msra.mxu0 0.0
    %149 = vmatpush.msra.mxu0 0.0
    %150 = vmatpush.msra.mxu0 0.0
    %151 = vmatpush.msra.mxu0 %v47
    %152 = vmatpush.msra.mxu0 %v46
    %153 = vmatpush.msra.mxu0 %v45
    %154 = vmatpush.msra.mxu0 %v44
    %155 = vmatmul.f32.gmra.mxu0 %v134
    %v156 = vpop.f32.mrf.mxu0
    %v157 = vadd.f32 %v132, %v156
    %158 = vmatmul.f32.gmra.mxu0 %v137
    %v159 = vpop.f32.mrf.mxu0
    %v160 = vadd.f32 %v132, %v159
    %161 = vdwg.mxu0
    %v162 = vlaneseq
    %v163 = vshrl.u32 %v162, 7
    %v164 = vadd.s32 %v163, 8
    %v165 = vadd.s32 %v163, 16
    %v166 = vadd.s32 %v163, 24
    %v167 = vlaneseq
    %v168 = vand.u32 %v167, 127
    %v169 = vshra.s32 %v163, 2
    %v170 = vshra.s32 %v164, 2
    %v171 = vshra.s32 %v165, 2
    %v172 = vshra.s32 %v166, 2
    %v173 = vshra.s32 %v168, 2
    %vm174 = vcmp.eq.s32.totalorder %v169, %v173
    %vm175 = vcmp.eq.s32.totalorder %v170, %v173
    %vm176 = vcmp.eq.s32.totalorder %v171, %v173
    %vm177 = vcmp.eq.s32.totalorder %v172, %v173
    %v178 = vsel %vm174, 1, 0
    %v179 = vsel %vm175, 1, 0
    %v180 = vsel %vm176, 1, 0
    %v181 = vsel %vm177, 1, 0
    %v182 = vcvt.s32.f32 %v178
    %v183 = vcvt.s32.f32 %v179
    %v184 = vcvt.s32.f32 %v180
    %v185 = vcvt.s32.f32 %v181
    %v188 = vrot.slane %v157, 1
    %v189 = vrot.slane %v157, 2
    %v190 = vrot.slane %v157, 3
    %v191 = vrot.slane %v157, 4
    %v192 = vrot.slane %v157, 5
    %v193 = vrot.slane %v157, 6
    %v194 = vrot.slane %v157, 7
    %v195 = vrot.slane %v160, 1
    %v196 = vrot.slane %v160, 2
    %v197 = vrot.slane %v160, 3
    %v198 = vrot.slane %v160, 4
    %v199 = vrot.slane %v160, 5
    %v200 = vrot.slane %v160, 6
    %v201 = vrot.slane %v160, 7
    %v202 = vperm.slane %v157, 0
    %v203 = vperm.slane %v188, 0
    %v204 = vperm.slane %v189, 0
    %v205 = vperm.slane %v190, 0
    %v206 = vperm.slane %v191, 0
    %v207 = vperm.slane %v192, 0
    %v208 = vperm.slane %v193, 0
    %v209 = vperm.slane %v194, 0
    %v210 = vperm.slane %v160, 0
    %v211 = vperm.slane %v195, 0
    %v212 = vperm.slane %v196, 0
    %v213 = vperm.slane %v197, 0
    %v214 = vperm.slane %v198, 0
    %v215 = vperm.slane %v199, 0
    %v216 = vperm.slane %v200, 0
    %v217 = vperm.slane %v201, 0
    %234 = vrot.lane.b32.xlu0 %v157, 96
    %v235 = vpop.permute.xlu0 %234
    %236 = vrot.lane.b32.xlu0 %v160, 96
    %v237 = vpop.permute.xlu0 %236
    %v240 = vmul.f32 %v202, %v235
    %v241 = vmul.f32 %v203, %v235
    %v242 = vmul.f32 %v204, %v235
    %v243 = vmul.f32 %v205, %v235
    %v244 = vmul.f32 %v206, %v235
    %v245 = vmul.f32 %v207, %v235
    %v246 = vmul.f32 %v208, %v235
    %v247 = vmul.f32 %v209, %v235
    %v248 = vmul.f32 %v210, %v237
    %v249 = vmul.f32 %v211, %v237
    %v250 = vmul.f32 %v212, %v237
    %v251 = vmul.f32 %v213, %v237
    %v252 = vmul.f32 %v214, %v237
    %v253 = vmul.f32 %v215, %v237
    %v254 = vmul.f32 %v216, %v237
    %v255 = vmul.f32 %v217, %v237
    %v257 = vsel %vm74, %v240, 0
    %v260 = vsel %vm74, %v241, 0
    %v263 = vsel %vm74, %v242, 0
    %v266 = vsel %vm74, %v243, 0
    %v269 = vsel %vm74, %v244, 0
    %v272 = vsel %vm74, %v245, 0
    %v275 = vsel %vm74, %v246, 0
    %v278 = vsel %vm74, %v247, 0
    %v281 = vsel %vm74, %v248, 0
    %v284 = vsel %vm74, %v249, 0
    %v287 = vsel %vm74, %v250, 0
    %v290 = vsel %vm74, %v251, 0
    %v293 = vsel %vm74, %v252, 0
    %v296 = vsel %vm74, %v253, 0
    %v299 = vsel %vm74, %v254, 0
    %v302 = vsel %vm74, %v255, 0
    %304 = vmatpush.msra.mxu0 0.0
    %305 = vmatpush.msra.mxu0 0.0
    %306 = vmatpush.msra.mxu0 0.0
    %307 = vmatpush.msra.mxu0 0.0
    %308 = vmatpush.msra.mxu0 0.0
    %309 = vmatpush.msra.mxu0 0.0
    %310 = vmatpush.msra.mxu0 0.0
    %311 = vmatpush.msra.mxu0 0.0
    %312 = vmatpush.msra.mxu0 0.0
    %313 = vmatpush.msra.mxu0 0.0
    %314 = vmatpush.msra.mxu0 0.0
    %315 = vmatpush.msra.mxu0 0.0
    %316 = vmatpush.msra.mxu0 %v185
    %317 = vmatpush.msra.mxu0 %v184
    %318 = vmatpush.msra.mxu0 %v183
    %319 = vmatpush.msra.mxu0 %v182
    %320 = vmatmul.f32.gmra.mxu0 %v257
    %v321 = vpop.f32.mrf.mxu0
    %v322 = vadd.f32 0.0, %v321
    %323 = vmatmul.f32.gmra.mxu0 %v260
    %v324 = vpop.f32.mrf.mxu0
    %v325 = vadd.f32 0.0, %v324
    %326 = vmatmul.f32.gmra.mxu0 %v263
    %v327 = vpop.f32.mrf.mxu0
    %v328 = vadd.f32 0.0, %v327
    %329 = vmatmul.f32.gmra.mxu0 %v266
    %v330 = vpop.f32.mrf.mxu0
    %v331 = vadd.f32 0.0, %v330
    %332 = vmatmul.f32.gmra.mxu0 %v269
    %v333 = vpop.f32.mrf.mxu0
    %v334 = vadd.f32 0.0, %v333
    %335 = vmatmul.f32.gmra.mxu0 %v272
    %v336 = vpop.f32.mrf.mxu0
    %v337 = vadd.f32 0.0, %v336
    %338 = vmatmul.f32.gmra.mxu0 %v275
    %v339 = vpop.f32.mrf.mxu0
    %v340 = vadd.f32 0.0, %v339
    %341 = vmatmul.f32.gmra.mxu0 %v278
    %v342 = vpop.f32.mrf.mxu0
    %v343 = vadd.f32 0.0, %v342
    %344 = vmatmul.f32.gmra.mxu0 %v281
    %v345 = vpop.f32.mrf.mxu0
    %v346 = vadd.f32 0.0, %v345
    %347 = vmatmul.f32.gmra.mxu0 %v284
    %v348 = vpop.f32.mrf.mxu0
    %v349 = vadd.f32 0.0, %v348
    %350 = vmatmul.f32.gmra.mxu0 %v287
    %v351 = vpop.f32.mrf.mxu0
    %v352 = vadd.f32 0.0, %v351
    %353 = vmatmul.f32.gmra.mxu0 %v290
    %v354 = vpop.f32.mrf.mxu0
    %v355 = vadd.f32 0.0, %v354
    %356 = vmatmul.f32.gmra.mxu0 %v293
    %v357 = vpop.f32.mrf.mxu0
    %v358 = vadd.f32 0.0, %v357
    %359 = vmatmul.f32.gmra.mxu0 %v296
    %v360 = vpop.f32.mrf.mxu0
    %v361 = vadd.f32 0.0, %v360
    %362 = vmatmul.f32.gmra.mxu0 %v299
    %v363 = vpop.f32.mrf.mxu0
    %v364 = vadd.f32 0.0, %v363
    %365 = vmatmul.f32.gmra.mxu0 %v302
    %v366 = vpop.f32.mrf.mxu0
    %v367 = vadd.f32 0.0, %v366
    %368 = vdwg.mxu0
    %v369 = vsel %vm74, %v322, -inf
    %v370 = vrot.slane %v369, 4
    %v371 = vmax.f32 %v369, %v370
    %v372 = vrot.slane %v371, 2
    %v373 = vmax.f32 %v371, %v372
    %v374 = vrot.slane %v373, 1
    %v375 = vmax.f32 %v373, %v374
    %v376 = vsel %vm74, %v325, -inf
    %v377 = vrot.slane %v376, 4
    %v378 = vmax.f32 %v376, %v377
    %v379 = vrot.slane %v378, 2
    %v380 = vmax.f32 %v378, %v379
    %v381 = vrot.slane %v380, 1
    %v382 = vmax.f32 %v380, %v381
    %v383 = vsel %vm74, %v328, -inf
    %v384 = vrot.slane %v383, 4
    %v385 = vmax.f32 %v383, %v384
    %v386 = vrot.slane %v385, 2
    %v387 = vmax.f32 %v385, %v386
    %v388 = vrot.slane %v387, 1
    %v389 = vmax.f32 %v387, %v388
    %v390 = vsel %vm74, %v331, -inf
    %v391 = vrot.slane %v390, 4
    %v392 = vmax.f32 %v390, %v391
    %v393 = vrot.slane %v392, 2
    %v394 = vmax.f32 %v392, %v393
    %v395 = vrot.slane %v394, 1
    %v396 = vmax.f32 %v394, %v395
    %v397 = vsel %vm74, %v334, -inf
    %v398 = vrot.slane %v397, 4
    %v399 = vmax.f32 %v397, %v398
    %v400 = vrot.slane %v399, 2
    %v401 = vmax.f32 %v399, %v400
    %v402 = vrot.slane %v401, 1
    %v403 = vmax.f32 %v401, %v402
    %v404 = vsel %vm74, %v337, -inf
    %v405 = vrot.slane %v404, 4
    %v406 = vmax.f32 %v404, %v405
    %v407 = vrot.slane %v406, 2
    %v408 = vmax.f32 %v406, %v407
    %v409 = vrot.slane %v408, 1
    %v410 = vmax.f32 %v408, %v409
    %v411 = vsel %vm74, %v340, -inf
    %v412 = vrot.slane %v411, 4
    %v413 = vmax.f32 %v411, %v412
    %v414 = vrot.slane %v413, 2
    %v415 = vmax.f32 %v413, %v414
    %v416 = vrot.slane %v415, 1
    %v417 = vmax.f32 %v415, %v416
    %v418 = vsel %vm74, %v343, -inf
    %v419 = vrot.slane %v418, 4
    %v420 = vmax.f32 %v418, %v419
    %v421 = vrot.slane %v420, 2
    %v422 = vmax.f32 %v420, %v421
    %v423 = vrot.slane %v422, 1
    %v424 = vmax.f32 %v422, %v423
    %v425 = vsel %vm74, %v346, -inf
    %v426 = vrot.slane %v425, 4
    %v427 = vmax.f32 %v425, %v426
    %v428 = vrot.slane %v427, 2
    %v429 = vmax.f32 %v427, %v428
    %v430 = vrot.slane %v429, 1
    %v431 = vmax.f32 %v429, %v430
    %v432 = vsel %vm74, %v349, -inf
    %v433 = vrot.slane %v432, 4
    %v434 = vmax.f32 %v432, %v433
    %v435 = vrot.slane %v434, 2
    %v436 = vmax.f32 %v434, %v435
    %v437 = vrot.slane %v436, 1
    %v438 = vmax.f32 %v436, %v437
    %v439 = vsel %vm74, %v352, -inf
    %v440 = vrot.slane %v439, 4
    %v441 = vmax.f32 %v439, %v440
    %v442 = vrot.slane %v441, 2
    %v443 = vmax.f32 %v441, %v442
    %v444 = vrot.slane %v443, 1
    %v445 = vmax.f32 %v443, %v444
    %v446 = vsel %vm74, %v355, -inf
    %v447 = vrot.slane %v446, 4
    %v448 = vmax.f32 %v446, %v447
    %v449 = vrot.slane %v448, 2
    %v450 = vmax.f32 %v448, %v449
    %v451 = vrot.slane %v450, 1
    %v452 = vmax.f32 %v450, %v451
    %v453 = vsel %vm74, %v358, -inf
    %v454 = vrot.slane %v453, 4
    %v455 = vmax.f32 %v453, %v454
    %v456 = vrot.slane %v455, 2
    %v457 = vmax.f32 %v455, %v456
    %v458 = vrot.slane %v457, 1
    %v459 = vmax.f32 %v457, %v458
    %v460 = vsel %vm74, %v361, -inf
    %v461 = vrot.slane %v460, 4
    %v462 = vmax.f32 %v460, %v461
    %v463 = vrot.slane %v462, 2
    %v464 = vmax.f32 %v462, %v463
    %v465 = vrot.slane %v464, 1
    %v466 = vmax.f32 %v464, %v465
    %v467 = vsel %vm74, %v364, -inf
    %v468 = vrot.slane %v467, 4
    %v469 = vmax.f32 %v467, %v468
    %v470 = vrot.slane %v469, 2
    %v471 = vmax.f32 %v469, %v470
    %v472 = vrot.slane %v471, 1
    %v473 = vmax.f32 %v471, %v472
    %v474 = vsel %vm74, %v367, -inf
    %v475 = vrot.slane %v474, 4
    %v476 = vmax.f32 %v474, %v475
    %v477 = vrot.slane %v476, 2
    %v478 = vmax.f32 %v476, %v477
    %v479 = vrot.slane %v478, 1
    %v480 = vmax.f32 %v478, %v479
    %v481 = vsub.f32 %v322, %v375
    %v482 = vsub.f32 %v325, %v382
    %v483 = vsub.f32 %v328, %v389
    %v484 = vsub.f32 %v331, %v396
    %v485 = vsub.f32 %v334, %v403
    %v486 = vsub.f32 %v337, %v410
    %v487 = vsub.f32 %v340, %v417
    %v488 = vsub.f32 %v343, %v424
    %v489 = vsub.f32 %v346, %v431
    %v490 = vsub.f32 %v349, %v438
    %v491 = vsub.f32 %v352, %v445
    %v492 = vsub.f32 %v355, %v452
    %v493 = vsub.f32 %v358, %v459
    %v494 = vsub.f32 %v361, %v466
    %v495 = vsub.f32 %v364, %v473
    %v496 = vsub.f32 %v367, %v480
    %v497 = vmul.f32 %v481, 1.442695
    %v498 = vpow.pop %v497
    %v499 = vmul.f32 %v482, 1.442695
    %v500 = vpow.pop %v499
    %v501 = vmul.f32 %v483, 1.442695
    %v502 = vpow.pop %v501
    %v503 = vmul.f32 %v484, 1.442695
    %v504 = vpow.pop %v503
    %v505 = vmul.f32 %v485, 1.442695
    %v506 = vpow.pop %v505
    %v507 = vmul.f32 %v486, 1.442695
    %v508 = vpow.pop %v507
    %v509 = vmul.f32 %v487, 1.442695
    %v510 = vpow.pop %v509
    %v511 = vmul.f32 %v488, 1.442695
    %v512 = vpow.pop %v511
    %v513 = vmul.f32 %v489, 1.442695
    %v514 = vpow.pop %v513
    %v515 = vmul.f32 %v490, 1.442695
    %v516 = vpow.pop %v515
    %v517 = vmul.f32 %v491, 1.442695
    %v518 = vpow.pop %v517
    %v519 = vmul.f32 %v492, 1.442695
    %v520 = vpow.pop %v519
    %v521 = vmul.f32 %v493, 1.442695
    %v522 = vpow.pop %v521
    %v523 = vmul.f32 %v494, 1.442695
    %v524 = vpow.pop %v523
    %v525 = vmul.f32 %v495, 1.442695
    %v526 = vpow.pop %v525
    %v527 = vmul.f32 %v496, 1.442695
    %v528 = vpow.pop %v527
    %v529 = vsel %vm74, %v498, 0.0
    %v530 = vrot.slane %v529, 4
    %v531 = vadd.f32 %v529, %v530
    %v532 = vrot.slane %v531, 2
    %v533 = vadd.f32 %v531, %v532
    %v534 = vrot.slane %v533, 1
    %v535 = vadd.f32 %v533, %v534
    %v536 = vsel %vm74, %v500, 0.0
    %v537 = vrot.slane %v536, 4
    %v538 = vadd.f32 %v536, %v537
    %v539 = vrot.slane %v538, 2
    %v540 = vadd.f32 %v538, %v539
    %v541 = vrot.slane %v540, 1
    %v542 = vadd.f32 %v540, %v541
    %v543 = vsel %vm74, %v502, 0.0
    %v544 = vrot.slane %v543, 4
    %v545 = vadd.f32 %v543, %v544
    %v546 = vrot.slane %v545, 2
    %v547 = vadd.f32 %v545, %v546
    %v548 = vrot.slane %v547, 1
    %v549 = vadd.f32 %v547, %v548
    %v550 = vsel %vm74, %v504, 0.0
    %v551 = vrot.slane %v550, 4
    %v552 = vadd.f32 %v550, %v551
    %v553 = vrot.slane %v552, 2
    %v554 = vadd.f32 %v552, %v553
    %v555 = vrot.slane %v554, 1
    %v556 = vadd.f32 %v554, %v555
    %v557 = vsel %vm74, %v506, 0.0
    %v558 = vrot.slane %v557, 4
    %v559 = vadd.f32 %v557, %v558
    %v560 = vrot.slane %v559, 2
    %v561 = vadd.f32 %v559, %v560
    %v562 = vrot.slane %v561, 1
    %v563 = vadd.f32 %v561, %v562
    %v564 = vsel %vm74, %v508, 0.0
    %v565 = vrot.slane %v564, 4
    %v566 = vadd.f32 %v564, %v565
    %v567 = vrot.slane %v566, 2
    %v568 = vadd.f32 %v566, %v567
    %v569 = vrot.slane %v568, 1
    %v570 = vadd.f32 %v568, %v569
    %v571 = vsel %vm74, %v510, 0.0
    %v572 = vrot.slane %v571, 4
    %v573 = vadd.f32 %v571, %v572
    %v574 = vrot.slane %v573, 2
    %v575 = vadd.f32 %v573, %v574
    %v576 = vrot.slane %v575, 1
    %v577 = vadd.f32 %v575, %v576
    %v578 = vsel %vm74, %v512, 0.0
    %v579 = vrot.slane %v578, 4
    %v580 = vadd.f32 %v578, %v579
    %v581 = vrot.slane %v580, 2
    %v582 = vadd.f32 %v580, %v581
    %v583 = vrot.slane %v582, 1
    %v584 = vadd.f32 %v582, %v583
    %v585 = vsel %vm74, %v514, 0.0
    %v586 = vrot.slane %v585, 4
    %v587 = vadd.f32 %v585, %v586
    %v588 = vrot.slane %v587, 2
    %v589 = vadd.f32 %v587, %v588
    %v590 = vrot.slane %v589, 1
    %v591 = vadd.f32 %v589, %v590
    %v592 = vsel %vm74, %v516, 0.0
    %v593 = vrot.slane %v592, 4
    %v594 = vadd.f32 %v592, %v593
    %v595 = vrot.slane %v594, 2
    %v596 = vadd.f32 %v594, %v595
    %v597 = vrot.slane %v596, 1
    %v598 = vadd.f32 %v596, %v597
    %v599 = vsel %vm74, %v518, 0.0
    %v600 = vrot.slane %v599, 4
    %v601 = vadd.f32 %v599, %v600
    %v602 = vrot.slane %v601, 2
    %v603 = vadd.f32 %v601, %v602
    %v604 = vrot.slane %v603, 1
    %v605 = vadd.f32 %v603, %v604
    %v606 = vsel %vm74, %v520, 0.0
    %v607 = vrot.slane %v606, 4
    %v608 = vadd.f32 %v606, %v607
    %v609 = vrot.slane %v608, 2
    %v610 = vadd.f32 %v608, %v609
    %v611 = vrot.slane %v610, 1
    %v612 = vadd.f32 %v610, %v611
    %v613 = vsel %vm74, %v522, 0.0
    %v614 = vrot.slane %v613, 4
    %v615 = vadd.f32 %v613, %v614
    %v616 = vrot.slane %v615, 2
    %v617 = vadd.f32 %v615, %v616
    %v618 = vrot.slane %v617, 1
    %v619 = vadd.f32 %v617, %v618
    %v620 = vsel %vm74, %v524, 0.0
    %v621 = vrot.slane %v620, 4
    %v622 = vadd.f32 %v620, %v621
    %v623 = vrot.slane %v622, 2
    %v624 = vadd.f32 %v622, %v623
    %v625 = vrot.slane %v624, 1
    %v626 = vadd.f32 %v624, %v625
    %v627 = vsel %vm74, %v526, 0.0
    %v628 = vrot.slane %v627, 4
    %v629 = vadd.f32 %v627, %v628
    %v630 = vrot.slane %v629, 2
    %v631 = vadd.f32 %v629, %v630
    %v632 = vrot.slane %v631, 1
    %v633 = vadd.f32 %v631, %v632
    %v634 = vsel %vm74, %v528, 0.0
    %v635 = vrot.slane %v634, 4
    %v636 = vadd.f32 %v634, %v635
    %v637 = vrot.slane %v636, 2
    %v638 = vadd.f32 %v636, %v637
    %v639 = vrot.slane %v638, 1
    %v640 = vadd.f32 %v638, %v639
    %v641 = vrcp.pop %v535
    %v642 = vmul.f32 %v535, %v641
    %v643 = vsub.f32 1.0, %v642
    %v644 = vmul.f32 %v641, %v643
    %v645 = vadd.f32 %v641, %v644
    %vm646 = vweird.f32 %v535
    %vm647 = vweird.f32 %v641
    %vm648 = vmor %vm646, %vm647
    %v649 = vsel %vm648, %v641, %v645
    %v650 = vand.u32 2147483647, %v535
    %vm651 = vcmp.eq.f32.partialorder %v650, 8.507059e+37
    %v652 = vand.u32 %v535, 2147483648
    %v653 = vor.u32 1.1754944e-38, %v652
    %v654 = vsel %vm651, %v653, %v649
    %v655 = vmul.f32 %v498, %v654
    %v656 = vrcp.pop %v542
    %v657 = vmul.f32 %v542, %v656
    %v658 = vsub.f32 1.0, %v657
    %v659 = vmul.f32 %v656, %v658
    %v660 = vadd.f32 %v656, %v659
    %vm661 = vweird.f32 %v542
    %vm662 = vweird.f32 %v656
    %vm663 = vmor %vm661, %vm662
    %v664 = vsel %vm663, %v656, %v660
    %v665 = vand.u32 2147483647, %v542
    %vm666 = vcmp.eq.f32.partialorder %v665, 8.507059e+37
    %v667 = vand.u32 %v542, 2147483648
    %v668 = vor.u32 1.1754944e-38, %v667
    %v669 = vsel %vm666, %v668, %v664
    %v670 = vmul.f32 %v500, %v669
    %v671 = vrcp.pop %v549
    %v672 = vmul.f32 %v549, %v671
    %v673 = vsub.f32 1.0, %v672
    %v674 = vmul.f32 %v671, %v673
    %v675 = vadd.f32 %v671, %v674
    %vm676 = vweird.f32 %v549
    %vm677 = vweird.f32 %v671
    %vm678 = vmor %vm676, %vm677
    %v679 = vsel %vm678, %v671, %v675
    %v680 = vand.u32 2147483647, %v549
    %vm681 = vcmp.eq.f32.partialorder %v680, 8.507059e+37
    %v682 = vand.u32 %v549, 2147483648
    %v683 = vor.u32 1.1754944e-38, %v682
    %v684 = vsel %vm681, %v683, %v679
    %v685 = vmul.f32 %v502, %v684
    %v686 = vrcp.pop %v556
    %v687 = vmul.f32 %v556, %v686
    %v688 = vsub.f32 1.0, %v687
    %v689 = vmul.f32 %v686, %v688
    %v690 = vadd.f32 %v686, %v689
    %vm691 = vweird.f32 %v556
    %vm692 = vweird.f32 %v686
    %vm693 = vmor %vm691, %vm692
    %v694 = vsel %vm693, %v686, %v690
    %v695 = vand.u32 2147483647, %v556
    %vm696 = vcmp.eq.f32.partialorder %v695, 8.507059e+37
    %v697 = vand.u32 %v556, 2147483648
    %v698 = vor.u32 1.1754944e-38, %v697
    %v699 = vsel %vm696, %v698, %v694
    %v700 = vmul.f32 %v504, %v699
    %v701 = vrcp.pop %v563
    %v702 = vmul.f32 %v563, %v701
    %v703 = vsub.f32 1.0, %v702
    %v704 = vmul.f32 %v701, %v703
    %v705 = vadd.f32 %v701, %v704
    %vm706 = vweird.f32 %v563
    %vm707 = vweird.f32 %v701
    %vm708 = vmor %vm706, %vm707
    %v709 = vsel %vm708, %v701, %v705
    %v710 = vand.u32 2147483647, %v563
    %vm711 = vcmp.eq.f32.partialorder %v710, 8.507059e+37
    %v712 = vand.u32 %v563, 2147483648
    %v713 = vor.u32 1.1754944e-38, %v712
    %v714 = vsel %vm711, %v713, %v709
    %v715 = vmul.f32 %v506, %v714
    %v716 = vrcp.pop %v570
    %v717 = vmul.f32 %v570, %v716
    %v718 = vsub.f32 1.0, %v717
    %v719 = vmul.f32 %v716, %v718
    %v720 = vadd.f32 %v716, %v719
    %vm721 = vweird.f32 %v570
    %vm722 = vweird.f32 %v716
    %vm723 = vmor %vm721, %vm722
    %v724 = vsel %vm723, %v716, %v720
    %v725 = vand.u32 2147483647, %v570
    %vm726 = vcmp.eq.f32.partialorder %v725, 8.507059e+37
    %v727 = vand.u32 %v570, 2147483648
    %v728 = vor.u32 1.1754944e-38, %v727
    %v729 = vsel %vm726, %v728, %v724
    %v730 = vmul.f32 %v508, %v729
    %v731 = vrcp.pop %v577
    %v732 = vmul.f32 %v577, %v731
    %v733 = vsub.f32 1.0, %v732
    %v734 = vmul.f32 %v731, %v733
    %v735 = vadd.f32 %v731, %v734
    %vm736 = vweird.f32 %v577
    %vm737 = vweird.f32 %v731
    %vm738 = vmor %vm736, %vm737
    %v739 = vsel %vm738, %v731, %v735
    %v740 = vand.u32 2147483647, %v577
    %vm741 = vcmp.eq.f32.partialorder %v740, 8.507059e+37
    %v742 = vand.u32 %v577, 2147483648
    %v743 = vor.u32 1.1754944e-38, %v742
    %v744 = vsel %vm741, %v743, %v739
    %v745 = vmul.f32 %v510, %v744
    %v746 = vrcp.pop %v584
    %v747 = vmul.f32 %v584, %v746
    %v748 = vsub.f32 1.0, %v747
    %v749 = vmul.f32 %v746, %v748
    %v750 = vadd.f32 %v746, %v749
    %vm751 = vweird.f32 %v584
    %vm752 = vweird.f32 %v746
    %vm753 = vmor %vm751, %vm752
    %v754 = vsel %vm753, %v746, %v750
    %v755 = vand.u32 2147483647, %v584
    %vm756 = vcmp.eq.f32.partialorder %v755, 8.507059e+37
    %v757 = vand.u32 %v584, 2147483648
    %v758 = vor.u32 1.1754944e-38, %v757
    %v759 = vsel %vm756, %v758, %v754
    %v760 = vmul.f32 %v512, %v759
    %v761 = vrcp.pop %v591
    %v762 = vmul.f32 %v591, %v761
    %v763 = vsub.f32 1.0, %v762
    %v764 = vmul.f32 %v761, %v763
    %v765 = vadd.f32 %v761, %v764
    %vm766 = vweird.f32 %v591
    %vm767 = vweird.f32 %v761
    %vm768 = vmor %vm766, %vm767
    %v769 = vsel %vm768, %v761, %v765
    %v770 = vand.u32 2147483647, %v591
    %vm771 = vcmp.eq.f32.partialorder %v770, 8.507059e+37
    %v772 = vand.u32 %v591, 2147483648
    %v773 = vor.u32 1.1754944e-38, %v772
    %v774 = vsel %vm771, %v773, %v769
    %v775 = vmul.f32 %v514, %v774
    %v776 = vrcp.pop %v598
    %v777 = vmul.f32 %v598, %v776
    %v778 = vsub.f32 1.0, %v777
    %v779 = vmul.f32 %v776, %v778
    %v780 = vadd.f32 %v776, %v779
    %vm781 = vweird.f32 %v598
    %vm782 = vweird.f32 %v776
    %vm783 = vmor %vm781, %vm782
    %v784 = vsel %vm783, %v776, %v780
    %v785 = vand.u32 2147483647, %v598
    %vm786 = vcmp.eq.f32.partialorder %v785, 8.507059e+37
    %v787 = vand.u32 %v598, 2147483648
    %v788 = vor.u32 1.1754944e-38, %v787
    %v789 = vsel %vm786, %v788, %v784
    %v790 = vmul.f32 %v516, %v789
    %v791 = vrcp.pop %v605
    %v792 = vmul.f32 %v605, %v791
    %v793 = vsub.f32 1.0, %v792
    %v794 = vmul.f32 %v791, %v793
    %v795 = vadd.f32 %v791, %v794
    %vm796 = vweird.f32 %v605
    %vm797 = vweird.f32 %v791
    %vm798 = vmor %vm796, %vm797
    %v799 = vsel %vm798, %v791, %v795
    %v800 = vand.u32 2147483647, %v605
    %vm801 = vcmp.eq.f32.partialorder %v800, 8.507059e+37
    %v802 = vand.u32 %v605, 2147483648
    %v803 = vor.u32 1.1754944e-38, %v802
    %v804 = vsel %vm801, %v803, %v799
    %v805 = vmul.f32 %v518, %v804
    %v806 = vrcp.pop %v612
    %v807 = vmul.f32 %v612, %v806
    %v808 = vsub.f32 1.0, %v807
    %v809 = vmul.f32 %v806, %v808
    %v810 = vadd.f32 %v806, %v809
    %vm811 = vweird.f32 %v612
    %vm812 = vweird.f32 %v806
    %vm813 = vmor %vm811, %vm812
    %v814 = vsel %vm813, %v806, %v810
    %v815 = vand.u32 2147483647, %v612
    %vm816 = vcmp.eq.f32.partialorder %v815, 8.507059e+37
    %v817 = vand.u32 %v612, 2147483648
    %v818 = vor.u32 1.1754944e-38, %v817
    %v819 = vsel %vm816, %v818, %v814
    %v820 = vmul.f32 %v520, %v819
    %v821 = vrcp.pop %v619
    %v822 = vmul.f32 %v619, %v821
    %v823 = vsub.f32 1.0, %v822
    %v824 = vmul.f32 %v821, %v823
    %v825 = vadd.f32 %v821, %v824
    %vm826 = vweird.f32 %v619
    %vm827 = vweird.f32 %v821
    %vm828 = vmor %vm826, %vm827
    %v829 = vsel %vm828, %v821, %v825
    %v830 = vand.u32 2147483647, %v619
    %vm831 = vcmp.eq.f32.partialorder %v830, 8.507059e+37
    %v832 = vand.u32 %v619, 2147483648
    %v833 = vor.u32 1.1754944e-38, %v832
    %v834 = vsel %vm831, %v833, %v829
    %v835 = vmul.f32 %v522, %v834
    %v836 = vrcp.pop %v626
    %v837 = vmul.f32 %v626, %v836
    %v838 = vsub.f32 1.0, %v837
    %v839 = vmul.f32 %v836, %v838
    %v840 = vadd.f32 %v836, %v839
    %vm841 = vweird.f32 %v626
    %vm842 = vweird.f32 %v836
    %vm843 = vmor %vm841, %vm842
    %v844 = vsel %vm843, %v836, %v840
    %v845 = vand.u32 2147483647, %v626
    %vm846 = vcmp.eq.f32.partialorder %v845, 8.507059e+37
    %v847 = vand.u32 %v626, 2147483648
    %v848 = vor.u32 1.1754944e-38, %v847
    %v849 = vsel %vm846, %v848, %v844
    %v850 = vmul.f32 %v524, %v849
    %v851 = vrcp.pop %v633
    %v852 = vmul.f32 %v633, %v851
    %v853 = vsub.f32 1.0, %v852
    %v854 = vmul.f32 %v851, %v853
    %v855 = vadd.f32 %v851, %v854
    %vm856 = vweird.f32 %v633
    %vm857 = vweird.f32 %v851
    %vm858 = vmor %vm856, %vm857
    %v859 = vsel %vm858, %v851, %v855
    %v860 = vand.u32 2147483647, %v633
    %vm861 = vcmp.eq.f32.partialorder %v860, 8.507059e+37
    %v862 = vand.u32 %v633, 2147483648
    %v863 = vor.u32 1.1754944e-38, %v862
    %v864 = vsel %vm861, %v863, %v859
    %v865 = vmul.f32 %v526, %v864
    %v866 = vrcp.pop %v640
    %v867 = vmul.f32 %v640, %v866
    %v868 = vsub.f32 1.0, %v867
    %v869 = vmul.f32 %v866, %v868
    %v870 = vadd.f32 %v866, %v869
    %vm871 = vweird.f32 %v640
    %vm872 = vweird.f32 %v866
    %vm873 = vmor %vm871, %vm872
    %v874 = vsel %vm873, %v866, %v870
    %v875 = vand.u32 2147483647, %v640
    %vm876 = vcmp.eq.f32.partialorder %v875, 8.507059e+37
    %v877 = vand.u32 %v640, 2147483648
    %v878 = vor.u32 1.1754944e-38, %v877
    %v879 = vsel %vm876, %v878, %v874
    %v880 = vmul.f32 %v528, %v879
    %881 = vrot.lane.b32.xlu0 %v157, 64
    %v882 = vpop.permute.xlu0 %881
    %883 = vrot.lane.b32.xlu0 %v160, 64
    %v884 = vpop.permute.xlu0 %883
    %v887 = vmul.f32 %v655, %v882
    %v888 = vmul.f32 %v670, %v882
    %v889 = vmul.f32 %v685, %v882
    %v890 = vmul.f32 %v700, %v882
    %v891 = vmul.f32 %v715, %v882
    %v892 = vmul.f32 %v730, %v882
    %v893 = vmul.f32 %v745, %v882
    %v894 = vmul.f32 %v760, %v882
    %v895 = vmul.f32 %v775, %v884
    %v896 = vmul.f32 %v790, %v884
    %v897 = vmul.f32 %v805, %v884
    %v898 = vmul.f32 %v820, %v884
    %v899 = vmul.f32 %v835, %v884
    %v900 = vmul.f32 %v850, %v884
    %v901 = vmul.f32 %v865, %v884
    %v902 = vmul.f32 %v880, %v884
    %v903 = vsel %vm74, %v887, 0.0
    %v904 = vrot.slane %v903, 4
    %v905 = vadd.f32 %v903, %v904
    %v906 = vrot.slane %v905, 2
    %v907 = vadd.f32 %v905, %v906
    %v908 = vrot.slane %v907, 1
    %v909 = vadd.f32 %v907, %v908
    %v910 = vsel %vm74, %v888, 0.0
    %v911 = vrot.slane %v910, 4
    %v912 = vadd.f32 %v910, %v911
    %v913 = vrot.slane %v912, 2
    %v914 = vadd.f32 %v912, %v913
    %v915 = vrot.slane %v914, 1
    %v916 = vadd.f32 %v914, %v915
    %v917 = vsel %vm74, %v889, 0.0
    %v918 = vrot.slane %v917, 4
    %v919 = vadd.f32 %v917, %v918
    %v920 = vrot.slane %v919, 2
    %v921 = vadd.f32 %v919, %v920
    %v922 = vrot.slane %v921, 1
    %v923 = vadd.f32 %v921, %v922
    %v924 = vsel %vm74, %v890, 0.0
    %v925 = vrot.slane %v924, 4
    %v926 = vadd.f32 %v924, %v925
    %v927 = vrot.slane %v926, 2
    %v928 = vadd.f32 %v926, %v927
    %v929 = vrot.slane %v928, 1
    %v930 = vadd.f32 %v928, %v929
    %v931 = vsel %vm74, %v891, 0.0
    %v932 = vrot.slane %v931, 4
    %v933 = vadd.f32 %v931, %v932
    %v934 = vrot.slane %v933, 2
    %v935 = vadd.f32 %v933, %v934
    %v936 = vrot.slane %v935, 1
    %v937 = vadd.f32 %v935, %v936
    %v938 = vsel %vm74, %v892, 0.0
    %v939 = vrot.slane %v938, 4
    %v940 = vadd.f32 %v938, %v939
    %v941 = vrot.slane %v940, 2
    %v942 = vadd.f32 %v940, %v941
    %v943 = vrot.slane %v942, 1
    %v944 = vadd.f32 %v942, %v943
    %v945 = vsel %vm74, %v893, 0.0
    %v946 = vrot.slane %v945, 4
    %v947 = vadd.f32 %v945, %v946
    %v948 = vrot.slane %v947, 2
    %v949 = vadd.f32 %v947, %v948
    %v950 = vrot.slane %v949, 1
    %v951 = vadd.f32 %v949, %v950
    %v952 = vsel %vm74, %v894, 0.0
    %v953 = vrot.slane %v952, 4
    %v954 = vadd.f32 %v952, %v953
    %v955 = vrot.slane %v954, 2
    %v956 = vadd.f32 %v954, %v955
    %v957 = vrot.slane %v956, 1
    %v958 = vadd.f32 %v956, %v957
    %v959 = vsel %vm74, %v895, 0.0
    %v960 = vrot.slane %v959, 4
    %v961 = vadd.f32 %v959, %v960
    %v962 = vrot.slane %v961, 2
    %v963 = vadd.f32 %v961, %v962
    %v964 = vrot.slane %v963, 1
    %v965 = vadd.f32 %v963, %v964
    %v966 = vsel %vm74, %v896, 0.0
    %v967 = vrot.slane %v966, 4
    %v968 = vadd.f32 %v966, %v967
    %v969 = vrot.slane %v968, 2
    %v970 = vadd.f32 %v968, %v969
    %v971 = vrot.slane %v970, 1
    %v972 = vadd.f32 %v970, %v971
    %v973 = vsel %vm74, %v897, 0.0
    %v974 = vrot.slane %v973, 4
    %v975 = vadd.f32 %v973, %v974
    %v976 = vrot.slane %v975, 2
    %v977 = vadd.f32 %v975, %v976
    %v978 = vrot.slane %v977, 1
    %v979 = vadd.f32 %v977, %v978
    %v980 = vsel %vm74, %v898, 0.0
    %v981 = vrot.slane %v980, 4
    %v982 = vadd.f32 %v980, %v981
    %v983 = vrot.slane %v982, 2
    %v984 = vadd.f32 %v982, %v983
    %v985 = vrot.slane %v984, 1
    %v986 = vadd.f32 %v984, %v985
    %v987 = vsel %vm74, %v899, 0.0
    %v988 = vrot.slane %v987, 4
    %v989 = vadd.f32 %v987, %v988
    %v990 = vrot.slane %v989, 2
    %v991 = vadd.f32 %v989, %v990
    %v992 = vrot.slane %v991, 1
    %v993 = vadd.f32 %v991, %v992
    %v994 = vsel %vm74, %v900, 0.0
    %v995 = vrot.slane %v994, 4
    %v996 = vadd.f32 %v994, %v995
    %v997 = vrot.slane %v996, 2
    %v998 = vadd.f32 %v996, %v997
    %v999 = vrot.slane %v998, 1
    %v1000 = vadd.f32 %v998, %v999
    %v1001 = vsel %vm74, %v901, 0.0
    %v1002 = vrot.slane %v1001, 4
    %v1003 = vadd.f32 %v1001, %v1002
    %v1004 = vrot.slane %v1003, 2
    %v1005 = vadd.f32 %v1003, %v1004
    %v1006 = vrot.slane %v1005, 1
    %v1007 = vadd.f32 %v1005, %v1006
    %v1008 = vsel %vm74, %v902, 0.0
    %v1009 = vrot.slane %v1008, 4
    %v1010 = vadd.f32 %v1008, %v1009
    %v1011 = vrot.slane %v1010, 2
    %v1012 = vadd.f32 %v1010, %v1011
    %v1013 = vrot.slane %v1012, 1
    %v1014 = vadd.f32 %v1012, %v1013
    %v1015 = vperm.slane %v65, 0
    %vm1032 = vcmask 1041409
    %v1033 = vsel %vm1032, %v916, %v909
    %vm1034 = vcmask 1042434
    %v1035 = vsel %vm1034, %v923, %v1033
    %vm1036 = vcmask 1043459
    %v1037 = vsel %vm1036, %v930, %v1035
    %vm1038 = vcmask 1044484
    %v1039 = vsel %vm1038, %v937, %v1037
    %vm1040 = vcmask 1045509
    %v1041 = vsel %vm1040, %v944, %v1039
    %vm1042 = vcmask 1046534
    %v1043 = vsel %vm1042, %v951, %v1041
    %vm1044 = vcmask 1047559
    %v1045 = vsel %vm1044, %v958, %v1043
    %v1046 = vsel %vm1032, %v972, %v965
    %v1047 = vsel %vm1034, %v979, %v1046
    %v1048 = vsel %vm1036, %v986, %v1047
    %v1049 = vsel %vm1038, %v993, %v1048
    %v1050 = vsel %vm1040, %v1000, %v1049
    %v1051 = vsel %vm1042, %v1007, %v1050
    %v1052 = vsel %vm1044, %v1014, %v1051
    %v1053 = vsel %vm74, %v1045, 0
    %v1055 = vsel %vm74, %v1052, 0
    %1057 = vmatpush.msra.mxu0 0.0
    %1058 = vmatpush.msra.mxu0 0.0
    %1059 = vmatpush.msra.mxu0 0.0
    %1060 = vmatpush.msra.mxu0 0.0
    %1061 = vmatpush.msra.mxu0 0.0
    %1062 = vmatpush.msra.mxu0 0.0
    %1063 = vmatpush.msra.mxu0 0.0
    %1064 = vmatpush.msra.mxu0 0.0
    %1065 = vmatpush.msra.mxu0 0.0
    %1066 = vmatpush.msra.mxu0 0.0
    %1067 = vmatpush.msra.mxu0 0.0
    %1068 = vmatpush.msra.mxu0 0.0
    %1069 = vmatpush.msra.mxu0 %v51
    %1070 = vmatpush.msra.mxu0 %v50
    %1071 = vmatpush.msra.mxu0 %v49
    %1072 = vmatpush.msra.mxu0 %v48
    %1073 = vmatmul.f32.gmra.mxu0 %v1053
    %v1074 = vpop.f32.mrf.mxu0
    %v1075 = vadd.f32 %v1015, %v1074
    %1076 = vmatmul.f32.gmra.mxu0 %v1055
    %v1077 = vpop.f32.mrf.mxu0
    %v1078 = vadd.f32 %v1015, %v1077
    %1079 = vdwg.mxu0
    %v1080 = vadd.f32 %v72, %v1075
    %v1081 = vadd.f32 %v73, %v1078
    %v1082 = vsel %vm74, %v1080, 0.0
    %1083 = vadd.xlane.f32.xlu0 %v1082
    %v1084 = vpop.xlane.xlu0 %1083
    %v1085 = vsel %vm74, %v1081, 0.0
    %1086 = vadd.xlane.f32.xlu0 %v1085
    %v1087 = vpop.xlane.xlu0 %1086
    %v1088 = vmul.f32 %v1084, %v87
    %v1089 = vmul.f32 %v1087, %v87
    %v1090 = vsub.f32 %v1080, %v1088
    %v1091 = vsub.f32 %v1081, %v1089
    %v1092 = vmul.f32 %v1090, %v1090
    %v1093 = vmul.f32 %v1091, %v1091
    %v1094 = vsel %vm74, %v1092, 0.0
    %1095 = vadd.xlane.f32.xlu0 %v1094
    %v1096 = vpop.xlane.xlu0 %1095
    %v1097 = vsel %vm74, %v1093, 0.0
    %1098 = vadd.xlane.f32.xlu0 %v1097
    %v1099 = vpop.xlane.xlu0 %1098
    %v1100 = vmul.f32 %v1096, %v87
    %v1101 = vmul.f32 %v1099, %v87
    %v1102 = vadd.f32 %v1100, 1e-05
    %v1103 = vadd.f32 %v1101, 1e-05
    %v1104 = vrsqrt.pop %v1102
    %v1105 = vmul.f32 %v1104, %v1102
    %v1106 = vmul.f32 %v1105, %v1104
    %v1107 = vmul.f32 0.5, %v1106
    %v1108 = vsub.f32 1.5, %v1107
    %v1109 = vmul.f32 %v1104, %v1108
    %vm1110 = vweird.f32 %v1102
    %vm1111 = vweird.f32 %v1104
    %vm1112 = vmor %vm1110, %vm1111
    %v1113 = vsel %vm1112, %v1104, %v1109
    %v1114 = vrsqrt.pop %v1103
    %v1115 = vmul.f32 %v1114, %v1103
    %v1116 = vmul.f32 %v1115, %v1114
    %v1117 = vmul.f32 0.5, %v1116
    %v1118 = vsub.f32 1.5, %v1117
    %v1119 = vmul.f32 %v1114, %v1118
    %vm1120 = vweird.f32 %v1103
    %vm1121 = vweird.f32 %v1114
    %vm1122 = vmor %vm1120, %vm1121
    %v1123 = vsel %vm1122, %v1114, %v1119
    %v1124 = vmul.f32 %v1090, %v1113
    %v1125 = vmul.f32 %v1091, %v1123
    %v1126 = vperm.slane %v68, 0
    %v1127 = vmul.f32 %v1124, %v1126
    %v1128 = vmul.f32 %v1125, %v1126
    %v1129 = vperm.slane %v69, 0
    %v1130 = vadd.f32 %v1127, %v1129
    %v1131 = vadd.f32 %v1128, %v1129
    %v1132 = vperm.slane %v70, 0
    %v1134 = vsel %vm74, %v1130, 0
    %v1137 = vsel %vm74, %v1131, 0
    %1139 = vmatpush.msra.mxu0 0.0
    %1140 = vmatpush.msra.mxu0 0.0
    %1141 = vmatpush.msra.mxu0 0.0
    %1142 = vmatpush.msra.mxu0 0.0
    %1143 = vmatpush.msra.mxu0 0.0
    %1144 = vmatpush.msra.mxu0 0.0
    %1145 = vmatpush.msra.mxu0 0.0
    %1146 = vmatpush.msra.mxu0 0.0
    %1147 = vmatpush.msra.mxu0 0.0
    %1148 = vmatpush.msra.mxu0 0.0
    %1149 = vmatpush.msra.mxu0 0.0
    %1150 = vmatpush.msra.mxu0 0.0
    %1151 = vmatpush.msra.mxu0 %v55
    %1152 = vmatpush.msra.mxu0 %v54
    %1153 = vmatpush.msra.mxu0 %v53
    %1154 = vmatpush.msra.mxu0 %v52
    %1155 = vmatmul.f32.gmra.mxu0 %v1134
    %v1156 = vpop.f32.mrf.mxu0
    %v1157 = vadd.f32 %v1132, %v1156
    %1158 = vmatmul.f32.gmra.mxu0 %v1137
    %v1159 = vpop.f32.mrf.mxu0
    %v1160 = vadd.f32 %v1132, %v1159
    %1161 = vdwg.mxu0
    %v1162 = vmul.f32 %v1157, 0.5
    %v1163 = vmul.f32 %v1160, 0.5
    %v1164 = vmul.f32 %v1157, 0.044715
    %v1165 = vmul.f32 %v1160, 0.044715
    %v1166 = vmul.f32 %v1164, %v1157
    %v1167 = vmul.f32 %v1165, %v1160
    %v1168 = vmul.f32 %v1166, %v1157
    %v1169 = vmul.f32 %v1167, %v1160
    %v1170 = vadd.f32 %v1157, %v1168
    %v1171 = vadd.f32 %v1160, %v1169
    %v1172 = vmul.f32 %v1170, 0.7978846
    %v1173 = vmul.f32 %v1171, 0.7978846
    %v1174 = vtanh.pop %v1172
    %v1175 = vtanh.pop %v1173
    %v1176 = vadd.f32 %v1174, 1.0
    %v1177 = vadd.f32 %v1175, 1.0
    %v1178 = vmul.f32 %v1162, %v1176
    %v1179 = vmul.f32 %v1163, %v1177
    %v1180 = vperm.slane %v71, 0
    %vm1181 = vcmask 523264
    %v1183 = vsel %vm1181, %v1178, 0
    %v1186 = vsel %vm1181, %v1179, 0
    %1188 = vmatpush.msra.mxu0 0.0
    %1189 = vmatpush.msra.mxu0 0.0
    %1190 = vmatpush.msra.mxu0 0.0
    %1191 = vmatpush.msra.mxu0 0.0
    %1192 = vmatpush.msra.mxu0 0.0
    %1193 = vmatpush.msra.mxu0 0.0
    %1194 = vmatpush.msra.mxu0 0.0
    %1195 = vmatpush.msra.mxu0 0.0
    %1196 = vmatpush.msra.mxu0 %v63
    %1197 = vmatpush.msra.mxu0 %v62
    %1198 = vmatpush.msra.mxu0 %v61
    %1199 = vmatpush.msra.mxu0 %v60
    %1200 = vmatpush.msra.mxu0 %v59
    %1201 = vmatpush.msra.mxu0 %v58
    %1202 = vmatpush.msra.mxu0 %v57
    %1203 = vmatpush.msra.mxu0 %v56
    %1204 = vmatmul.f32.gmra.mxu0 %v1183
    %v1205 = vpop.f32.mrf.mxu0
    %v1206 = vadd.f32 %v1180, %v1205
    %1207 = vmatmul.f32.gmra.mxu0 %v1186
    %v1208 = vpop.f32.mrf.mxu0
    %v1209 = vadd.f32 %v1180, %v1208
    %1210 = vdwg.mxu0
    %v1211 = vadd.f32 %v1080, %v1206
    %v1212 = vadd.f32 %v1081, %v1209
    %1213 = vst.msk [vmem:[#allocation7] sm:$0xff] %vm74, %v1211
    %1214 = vst.msk [vmem:[#allocation7 + $0x8] sm:$0xff] %vm74, %v1212
    // Predicated region
    $region18: #{tpu_custom_call.1} parent=1 // pred_check
      _
    $region19: #{tpu_custom_call.1} parent=1 // pred_check_branch
      %1216 = sbr.rel (0) target = $region21
    $region20: #{tpu_custom_call.1} parent=1 // pred_region
      %1218 = vsyncadd [#allocation4], 0
      %s1219 = sshll.u32 [#allocation7], 4
      %s1220 = int_to_ptr.vmem [resolvable:$true] %s1219
      %s1221 = sshll.u32 %s2, 4
      %s1222 = int_to_ptr.hbm [resolvable:$true] %s1221
      %1227 = dma.vmem_to_hbm [thread:$0]  %s1220, 256, %s1222, [#allocation4], 128, 128, 8
    $region21: #{tpu_custom_call.1} parent=1 // pred_fallthru
      _
    // Predicated region
    $region22: #{tpu_custom_call.1} parent=1 // pred_check
      _
    $region23: #{tpu_custom_call.1} parent=1 // pred_check_branch
      %1229 = sbr.rel (0) target = $region25
    $region24: #{tpu_custom_call.1} parent=1 // pred_region
      %1231 = dma.done [#allocation4], 256
    $region25: #{tpu_custom_call.1} parent=1 // pred_fallthru
      _
    %1232 = vsyncpa [#allocation3], 1
    %1233 = vsyncpa [#allocation6], 1
    %1234 = vsyncpa [#allocation4], 1

</llo_original>
